<compile_context>
chip_gen: v7x
topology: tpu7x:2x2x1
jax: 0.10.0
libtpu: 0.0.40
codegen_flags: <defaults>
</compile_context>

<pallas_src>
import jax
import jax.numpy as jnp
from jax.experimental import pallas as pl
from jax.experimental.pallas import tpu as pltpu

# Logical layer sizes matching the PyTorch module, and sublane-padded sizes.
SIZES = [2, 20, 50, 50, 50, 20, 1]
PADDED = [2, 24, 56, 56, 56, 24, 1]


def _make_kernel(tn, chunk):
    """Build the MLP kernel for a lane tile of `tn` lanes, processed in
    `chunk`-lane sub-chunks with a static unrolled loop."""
    assert tn % chunk == 0
    n_chunks = tn // chunk

    def kernel(xt_ref,
               w1x_ref, w1t_ref, b1_ref,
               w2_ref, b2_ref,
               w3_ref, b3_ref,
               w4_ref, b4_ref,
               w5_ref, b5_ref,
               w6_ref, b6_ref,
               out_ref):
        # Load the tiny resident weights once per grid step.
        w1x = w1x_ref[...]   # (24, 1)
        w1t = w1t_ref[...]   # (24, 1)
        b1 = b1_ref[...]     # (24, 1)
        w2 = w2_ref[...]     # (56, 24)
        b2 = b2_ref[...]     # (56, 1)
        w3 = w3_ref[...]     # (56, 56)
        b3 = b3_ref[...]
        w4 = w4_ref[...]     # (56, 56)
        b4 = b4_ref[...]
        w5 = w5_ref[...]     # (24, 56)
        b5 = b5_ref[...]
        w6 = w6_ref[...]     # (24, 1)
        b6 = b6_ref[...]     # (1, 1)

        for c in range(n_chunks):            # static unroll: independent chains
            lo, hi = c * chunk, (c + 1) * chunk
            x = xt_ref[0:1, lo:hi]            # (1, chunk)
            t = xt_ref[1:2, lo:hi]            # (1, chunk)

            # Layer 1: K=2 contraction as two VPU broadcast MACs.
            h = jnp.tanh(w1x * x + w1t * t + b1)                            # (24, chunk)

            # Hidden layers on the MXU, f32 accumulation.
            h = jnp.tanh(jnp.dot(w2, h, preferred_element_type=jnp.float32) + b2)
            h = jnp.tanh(jnp.dot(w3, h, preferred_element_type=jnp.float32) + b3)
            h = jnp.tanh(jnp.dot(w4, h, preferred_element_type=jnp.float32) + b4)
            h = jnp.tanh(jnp.dot(w5, h, preferred_element_type=jnp.float32) + b5)

            # Final 1-output layer: VPU mul + sublane reduce (no MXU round trip).
            out = jnp.sum(w6 * h, axis=0, keepdims=True) + b6                # (1, chunk)
            out_ref[0:1, lo:hi] = out.astype(out_ref.dtype)

    return kernel


def _round_up(n, m):
    return ((n + m - 1) // m) * m


def _pad2d(a, rows, cols):
    r, c = a.shape
    return jnp.pad(a, ((0, rows - r), (0, cols - c)))


def _pick_tile(n):
    """Lane-tile size.  Small batches -> one grid step (step overhead
    dominates); large batches -> 1024-lane tiles (256-multiple => full MXU
    lane fill on v6e/v7x) with >= 2 'parallel' steps for v7x megacore."""
    if n <= 1024:
        return _round_up(n, 256)
    return 1024


def mlp_forward(x, t, params):
    """x: (N,1), t: (N,1) float32.  Returns (N,1) float32.

    params: list of (W, b) with W shape (d_in, d_out), b shape (1, d_out).
    """
    N = x.shape[0]
    tn = _pick_tile(N)
    pad_n = _round_up(N, tn)
    grid = pad_n // tn
    chunk = min(tn, 256)

    # One lane-dense (2, pad_n) input stream: row 0 = x, row 1 = t.
    xt = jnp.concatenate(
        [x.reshape(1, N), t.reshape(1, N)], axis=0).astype(jnp.float32)
    if pad_n != N:
        xt = jnp.pad(xt, ((0, 0), (0, pad_n - N)))

    # Pre-transpose + sublane-pad weights once:
    #   W (d_in,d_out) -> W^T (d_out_pad, d_in_pad); b (1,d_out) -> (d_out_pad, 1).
    # Zero padding keeps the math exact: padded rows produce tanh(0)=0 and are
    # multiplied by zero-padded weight columns downstream.
    (w1, b1), (w2, b2), (w3, b3), (w4, b4), (w5, b5), (w6, b6) = params
    p = PADDED
    w1T = w1.T                                        # (20, 2)
    w1x = _pad2d(w1T[:, 0:1], p[1], 1)                # (24, 1)
    w1t = _pad2d(w1T[:, 1:2], p[1], 1)                # (24, 1)
    b1c = _pad2d(b1.reshape(-1, 1), p[1], 1)          # (24, 1)
    w2T = _pad2d(w2.T, p[2], p[1]); b2c = _pad2d(b2.reshape(-1, 1), p[2], 1)
    w3T = _pad2d(w3.T, p[3], p[2]); b3c = _pad2d(b3.reshape(-1, 1), p[3], 1)
    w4T = _pad2d(w4.T, p[4], p[3]); b4c = _pad2d(b4.reshape(-1, 1), p[4], 1)
    w5T = _pad2d(w5.T, p[5], p[4]); b5c = _pad2d(b5.reshape(-1, 1), p[5], 1)
    w6c = _pad2d(w6, p[5], 1)                         # (24, 1) final-layer column
    b6c = b6.reshape(1, 1)                            # (1, 1)

    consts = [w1x, w1t, b1c, w2T, b2c, w3T, b3c, w4T, b4c, w5T, b5c, w6c, b6c]

    in_specs = [pl.BlockSpec((2, tn), lambda i: (0, i))]
    in_specs += [pl.BlockSpec(c.shape, lambda i: (0, 0)) for c in consts]

    out_row = pl.pallas_call(
        _make_kernel(tn, chunk),
        out_shape=jax.ShapeDtypeStruct((1, pad_n), jnp.float32),
        grid_spec=pl.GridSpec(
            grid=(grid,),
            in_specs=in_specs,
            out_specs=pl.BlockSpec((1, tn), lambda i: (0, i)),
        ),
        compiler_params=pltpu.CompilerParams(
            dimension_semantics=("parallel",)),
    )(xt, *consts)

    return out_row[:, :N].reshape(N, 1)


def init_params(key):
    """Deterministic init mimicking torch.nn.Linear default (uniform ±1/sqrt(fan_in))."""
    params = []
    for i in range(len(SIZES) - 1):
        din, dout = SIZES[i], SIZES[i + 1]
        key, kw, kb = jax.random.split(key, 3)
        bound = 1.0 / jnp.sqrt(jnp.float32(din))
        w = jax.random.uniform(kw, (din, dout), jnp.float32, -bound, bound)
        b = jax.random.uniform(kb, (1, dout), jnp.float32, -bound, bound)
        params.append((w, b))
    return params


def reference_forward(x, t, params):
    """Pure-JAX reference for correctness checking."""
    h = jnp.concatenate([x, t], axis=1)
    for i, (w, b) in enumerate(params):
        h = h @ w + b
        if i < len(params) - 1:
            h = jnp.tanh(h)
    return h


if __name__ == "__main__":
    key = jax.random.PRNGKey(0)
    params = init_params(key)

    # Inputs consistent with the script: x = linspace(0, R, 256).view(-1, 1),
    # t a matching (256, 1) column.
    R = 40.0
    N = 256
    x = jnp.linspace(0.0, R, N, dtype=jnp.float32).reshape(-1, 1)
    key, kt = jax.random.split(key)
    t = jax.random.uniform(kt, (N, 1), jnp.float32, 0.0, 1.0)

    out = mlp_forward(x, t, params)
    out = jax.block_until_ready(out)

    ref = reference_forward(x, t, params)
    assert out.shape == (N, 1)
    assert jnp.allclose(out, ref, atol=1e-5, rtol=1e-5), "mismatch vs reference"

    print("KERNEL_OK")
</pallas_src>

<mosaic_0001>
module attributes {stable_mosaic.version = 11 : i64} {
  func.func @kernel(%arg0: i32, %arg1: memref<2x256xf32, #tpu.memory_space<vmem>>, %arg2: memref<24x1xf32, #tpu.memory_space<vmem>>, %arg3: memref<24x1xf32, #tpu.memory_space<vmem>>, %arg4: memref<24x1xf32, #tpu.memory_space<vmem>>, %arg5: memref<56x24xf32, #tpu.memory_space<vmem>>, %arg6: memref<56x1xf32, #tpu.memory_space<vmem>>, %arg7: memref<56x56xf32, #tpu.memory_space<vmem>>, %arg8: memref<56x1xf32, #tpu.memory_space<vmem>>, %arg9: memref<56x56xf32, #tpu.memory_space<vmem>>, %arg10: memref<56x1xf32, #tpu.memory_space<vmem>>, %arg11: memref<24x56xf32, #tpu.memory_space<vmem>>, %arg12: memref<24x1xf32, #tpu.memory_space<vmem>>, %arg13: memref<24x1xf32, #tpu.memory_space<vmem>>, %arg14: memref<1x1xf32, #tpu.memory_space<vmem>>, %arg15: memref<1x256xf32, #tpu.memory_space<vmem>>) attributes {dimension_semantics = [#tpu.dimension_semantics<parallel>], iteration_bounds = array<i64: 1>, scalar_prefetch = 0 : i64, scratch_operands = 0 : i64, tpu.core_type = #tpu.core_type<tc>, window_params = [{transform_indices = @transform_0, window_bounds = array<i64: 2, 256>}, {pipeline_mode = #tpu.pipeline_mode<synchronous>, transform_indices = @transform_1, window_bounds = array<i64: 24, 1>}, {pipeline_mode = #tpu.pipeline_mode<synchronous>, transform_indices = @transform_2, window_bounds = array<i64: 24, 1>}, {pipeline_mode = #tpu.pipeline_mode<synchronous>, transform_indices = @transform_3, window_bounds = array<i64: 24, 1>}, {pipeline_mode = #tpu.pipeline_mode<synchronous>, transform_indices = @transform_4, window_bounds = array<i64: 56, 24>}, {pipeline_mode = #tpu.pipeline_mode<synchronous>, transform_indices = @transform_5, window_bounds = array<i64: 56, 1>}, {pipeline_mode = #tpu.pipeline_mode<synchronous>, transform_indices = @transform_6, window_bounds = array<i64: 56, 56>}, {pipeline_mode = #tpu.pipeline_mode<synchronous>, transform_indices = @transform_7, window_bounds = array<i64: 56, 1>}, {pipeline_mode = #tpu.pipeline_mode<synchronous>, transform_indices = @transform_8, window_bounds = array<i64: 56, 56>}, {pipeline_mode = #tpu.pipeline_mode<synchronous>, transform_indices = @transform_9, window_bounds = array<i64: 56, 1>}, {pipeline_mode = #tpu.pipeline_mode<synchronous>, transform_indices = @transform_10, window_bounds = array<i64: 24, 56>}, {pipeline_mode = #tpu.pipeline_mode<synchronous>, transform_indices = @transform_11, window_bounds = array<i64: 24, 1>}, {pipeline_mode = #tpu.pipeline_mode<synchronous>, transform_indices = @transform_12, window_bounds = array<i64: 24, 1>}, {pipeline_mode = #tpu.pipeline_mode<synchronous>, transform_indices = @transform_13, window_bounds = array<i64: 1, 1>}, {transform_indices = @transform_14, window_bounds = array<i64: 1, 256>}]} {
    %c0 = arith.constant 0 : index
    %c0_0 = arith.constant 0 : index
    %0 = vector.load %arg2[%c0, %c0_0] : memref<24x1xf32, #tpu.memory_space<vmem>>, vector<24x1xf32>
    %c0_1 = arith.constant 0 : index
    %c0_2 = arith.constant 0 : index
    %1 = vector.load %arg3[%c0_1, %c0_2] : memref<24x1xf32, #tpu.memory_space<vmem>>, vector<24x1xf32>
    %c0_3 = arith.constant 0 : index
    %c0_4 = arith.constant 0 : index
    %2 = vector.load %arg4[%c0_3, %c0_4] : memref<24x1xf32, #tpu.memory_space<vmem>>, vector<24x1xf32>
    %c0_5 = arith.constant 0 : index
    %c0_6 = arith.constant 0 : index
    %3 = vector.load %arg5[%c0_5, %c0_6] : memref<56x24xf32, #tpu.memory_space<vmem>>, vector<56x24xf32>
    %c0_7 = arith.constant 0 : index
    %c0_8 = arith.constant 0 : index
    %4 = vector.load %arg6[%c0_7, %c0_8] : memref<56x1xf32, #tpu.memory_space<vmem>>, vector<56x1xf32>
    %c0_9 = arith.constant 0 : index
    %c0_10 = arith.constant 0 : index
    %5 = vector.load %arg7[%c0_9, %c0_10] : memref<56x56xf32, #tpu.memory_space<vmem>>, vector<56x56xf32>
    %c0_11 = arith.constant 0 : index
    %c0_12 = arith.constant 0 : index
    %6 = vector.load %arg8[%c0_11, %c0_12] : memref<56x1xf32, #tpu.memory_space<vmem>>, vector<56x1xf32>
    %c0_13 = arith.constant 0 : index
    %c0_14 = arith.constant 0 : index
    %7 = vector.load %arg9[%c0_13, %c0_14] : memref<56x56xf32, #tpu.memory_space<vmem>>, vector<56x56xf32>
    %c0_15 = arith.constant 0 : index
    %c0_16 = arith.constant 0 : index
    %8 = vector.load %arg10[%c0_15, %c0_16] : memref<56x1xf32, #tpu.memory_space<vmem>>, vector<56x1xf32>
    %c0_17 = arith.constant 0 : index
    %c0_18 = arith.constant 0 : index
    %9 = vector.load %arg11[%c0_17, %c0_18] : memref<24x56xf32, #tpu.memory_space<vmem>>, vector<24x56xf32>
    %c0_19 = arith.constant 0 : index
    %c0_20 = arith.constant 0 : index
    %10 = vector.load %arg12[%c0_19, %c0_20] : memref<24x1xf32, #tpu.memory_space<vmem>>, vector<24x1xf32>
    %c0_21 = arith.constant 0 : index
    %c0_22 = arith.constant 0 : index
    %11 = vector.load %arg13[%c0_21, %c0_22] : memref<24x1xf32, #tpu.memory_space<vmem>>, vector<24x1xf32>
    %c0_23 = arith.constant 0 : index
    %c0_24 = arith.constant 0 : index
    %12 = vector.load %arg14[%c0_23, %c0_24] : memref<1x1xf32, #tpu.memory_space<vmem>>, vector<1x1xf32>
    %c0_25 = arith.constant 0 : index
    %c0_26 = arith.constant 0 : index
    %13 = vector.load %arg1[%c0_25, %c0_26] : memref<2x256xf32, #tpu.memory_space<vmem>>, vector<1x256xf32>
    %c1 = arith.constant 1 : index
    %c0_27 = arith.constant 0 : index
    %14 = vector.load %arg1[%c1, %c0_27] : memref<2x256xf32, #tpu.memory_space<vmem>>, vector<1x256xf32>
    %15 = vector.broadcast %0 : vector<24x1xf32> to vector<24x256xf32>
    %16 = vector.broadcast %13 : vector<1x256xf32> to vector<24x256xf32>
    %17 = arith.mulf %15, %16 : vector<24x256xf32>
    %18 = vector.broadcast %1 : vector<24x1xf32> to vector<24x256xf32>
    %19 = vector.broadcast %14 : vector<1x256xf32> to vector<24x256xf32>
    %20 = arith.mulf %18, %19 : vector<24x256xf32>
    %21 = arith.addf %17, %20 : vector<24x256xf32>
    %22 = vector.broadcast %2 : vector<24x1xf32> to vector<24x256xf32>
    %23 = arith.addf %21, %22 : vector<24x256xf32>
    %24 = math.tanh %23 : vector<24x256xf32>
    %cst = arith.constant dense<0.000000e+00> : vector<56x256xf32>
    %25 = tpu.matmul %3, %24, %cst {dimension_numbers = #tpu.dot_dimension_numbers<[1], [0], [0], [1], [0, 0, 1, 1], [], []>} : vector<56x24xf32>, vector<24x256xf32>, vector<56x256xf32> -> vector<56x256xf32>
    %26 = vector.broadcast %4 : vector<56x1xf32> to vector<56x256xf32>
    %27 = arith.addf %25, %26 : vector<56x256xf32>
    %28 = math.tanh %27 : vector<56x256xf32>
    %cst_28 = arith.constant dense<0.000000e+00> : vector<56x256xf32>
    %29 = tpu.matmul %5, %28, %cst_28 {dimension_numbers = #tpu.dot_dimension_numbers<[1], [0], [0], [1], [0, 0, 1, 1], [], []>} : vector<56x56xf32>, vector<56x256xf32>, vector<56x256xf32> -> vector<56x256xf32>
    %30 = vector.broadcast %6 : vector<56x1xf32> to vector<56x256xf32>
    %31 = arith.addf %29, %30 : vector<56x256xf32>
    %32 = math.tanh %31 : vector<56x256xf32>
    %cst_29 = arith.constant dense<0.000000e+00> : vector<56x256xf32>
    %33 = tpu.matmul %7, %32, %cst_29 {dimension_numbers = #tpu.dot_dimension_numbers<[1], [0], [0], [1], [0, 0, 1, 1], [], []>} : vector<56x56xf32>, vector<56x256xf32>, vector<56x256xf32> -> vector<56x256xf32>
    %34 = vector.broadcast %8 : vector<56x1xf32> to vector<56x256xf32>
    %35 = arith.addf %33, %34 : vector<56x256xf32>
    %36 = math.tanh %35 : vector<56x256xf32>
    %cst_30 = arith.constant dense<0.000000e+00> : vector<24x256xf32>
    %37 = tpu.matmul %9, %36, %cst_30 {dimension_numbers = #tpu.dot_dimension_numbers<[1], [0], [0], [1], [0, 0, 1, 1], [], []>} : vector<24x56xf32>, vector<56x256xf32>, vector<24x256xf32> -> vector<24x256xf32>
    %38 = vector.broadcast %10 : vector<24x1xf32> to vector<24x256xf32>
    %39 = arith.addf %37, %38 : vector<24x256xf32>
    %40 = math.tanh %39 : vector<24x256xf32>
    %41 = vector.broadcast %11 : vector<24x1xf32> to vector<24x256xf32>
    %42 = arith.mulf %41, %40 : vector<24x256xf32>
    %cst_31 = arith.constant dense<0.000000e+00> : vector<256xf32>
    %43 = vector.multi_reduction <add>, %42, %cst_31 [0] : vector<24x256xf32> to vector<256xf32>
    %44 = vector.shape_cast %43 : vector<256xf32> to vector<1x256xf32>
    %45 = vector.broadcast %12 : vector<1x1xf32> to vector<1x256xf32>
    %46 = arith.addf %44, %45 : vector<1x256xf32>
    %c0_32 = arith.constant 0 : index
    %c0_33 = arith.constant 0 : index
    %47 = vector.load %arg15[%c0_32, %c0_33] : memref<1x256xf32, #tpu.memory_space<vmem>>, vector<1x256xf32>
    tpu.vector_store %arg15[%c0_32, %c0_33], %46 {strides = array<i32>} : memref<1x256xf32, #tpu.memory_space<vmem>>, vector<1x256xf32>,
    return
  }
  func.func @transform_0(%arg0: i32) -> (i32, i32) {
    %c0_i32 = arith.constant 0 : i32
    %c0_i32_0 = arith.constant 0 : i32
    return %c0_i32, %arg0 : i32, i32
  }
  func.func @transform_1(%arg0: i32) -> (i32, i32) {
    %c0_i32 = arith.constant 0 : i32
    %c0_i32_0 = arith.constant 0 : i32
    %c0_i32_1 = arith.constant 0 : i32
    return %c0_i32, %c0_i32_0 : i32, i32
  }
  func.func @transform_2(%arg0: i32) -> (i32, i32) {
    %c0_i32 = arith.constant 0 : i32
    %c0_i32_0 = arith.constant 0 : i32
    %c0_i32_1 = arith.constant 0 : i32
    return %c0_i32, %c0_i32_0 : i32, i32
  }
  func.func @transform_3(%arg0: i32) -> (i32, i32) {
    %c0_i32 = arith.constant 0 : i32
    %c0_i32_0 = arith.constant 0 : i32
    %c0_i32_1 = arith.constant 0 : i32
    return %c0_i32, %c0_i32_0 : i32, i32
  }
  func.func @transform_4(%arg0: i32) -> (i32, i32) {
    %c0_i32 = arith.constant 0 : i32
    %c0_i32_0 = arith.constant 0 : i32
    %c0_i32_1 = arith.constant 0 : i32
    return %c0_i32, %c0_i32_0 : i32, i32
  }
  func.func @transform_5(%arg0: i32) -> (i32, i32) {
    %c0_i32 = arith.constant 0 : i32
    %c0_i32_0 = arith.constant 0 : i32
    %c0_i32_1 = arith.constant 0 : i32
    return %c0_i32, %c0_i32_0 : i32, i32
  }
  func.func @transform_6(%arg0: i32) -> (i32, i32) {
    %c0_i32 = arith.constant 0 : i32
    %c0_i32_0 = arith.constant 0 : i32
    %c0_i32_1 = arith.constant 0 : i32
    return %c0_i32, %c0_i32_0 : i32, i32
  }
  func.func @transform_7(%arg0: i32) -> (i32, i32) {
    %c0_i32 = arith.constant 0 : i32
    %c0_i32_0 = arith.constant 0 : i32
    %c0_i32_1 = arith.constant 0 : i32
    return %c0_i32, %c0_i32_0 : i32, i32
  }
  func.func @transform_8(%arg0: i32) -> (i32, i32) {
    %c0_i32 = arith.constant 0 : i32
    %c0_i32_0 = arith.constant 0 : i32
    %c0_i32_1 = arith.constant 0 : i32
    return %c0_i32, %c0_i32_0 : i32, i32
  }
  func.func @transform_9(%arg0: i32) -> (i32, i32) {
    %c0_i32 = arith.constant 0 : i32
    %c0_i32_0 = arith.constant 0 : i32
    %c0_i32_1 = arith.constant 0 : i32
    return %c0_i32, %c0_i32_0 : i32, i32
  }
  func.func @transform_10(%arg0: i32) -> (i32, i32) {
    %c0_i32 = arith.constant 0 : i32
    %c0_i32_0 = arith.constant 0 : i32
    %c0_i32_1 = arith.constant 0 : i32
    return %c0_i32, %c0_i32_0 : i32, i32
  }
  func.func @transform_11(%arg0: i32) -> (i32, i32) {
    %c0_i32 = arith.constant 0 : i32
    %c0_i32_0 = arith.constant 0 : i32
    %c0_i32_1 = arith.constant 0 : i32
    return %c0_i32, %c0_i32_0 : i32, i32
  }
  func.func @transform_12(%arg0: i32) -> (i32, i32) {
    %c0_i32 = arith.constant 0 : i32
    %c0_i32_0 = arith.constant 0 : i32
    %c0_i32_1 = arith.constant 0 : i32
    return %c0_i32, %c0_i32_0 : i32, i32
  }
  func.func @transform_13(%arg0: i32) -> (i32, i32) {
    %c0_i32 = arith.constant 0 : i32
    %c0_i32_0 = arith.constant 0 : i32
    %c0_i32_1 = arith.constant 0 : i32
    return %c0_i32, %c0_i32_0 : i32, i32
  }
  func.func @transform_14(%arg0: i32) -> (i32, i32) {
    %c0_i32 = arith.constant 0 : i32
    %c0_i32_0 = arith.constant 0 : i32
    return %c0_i32, %arg0 : i32, i32
  }
}

</mosaic_0001>

<llo_original>
// kernel: tpu_custom_call.1
$region0: #{tpu_custom_call.1}
  #allocation0 [shape = 'u32[]', space=smem, size = 0x4, offset = 0x4, fixed_abs, tag = 'smem constant byte address 0x4 - core index']
  #allocation1 [shape = 'u32[144,128]{1,0:T(1,128)}', space=vmem, size = 0x12000, scoped, tag = 'internal scratch']
  #allocation2 [shape = 'f32[1,1]{1,0:T(1,128)S(1)}', space=vmem, size = 0x200, scoped, tag = 'scoped memory for tpu_custom_call.1']
  %s0 = inlined_call_operand.vmem [shape: f32[2,256], index: 0, kind: input, shape index: {}]
  %s1 = inlined_call_operand.vmem [shape: f32[24,1], index: 1, kind: input, shape index: {}]
  %s2 = inlined_call_operand.vmem [shape: f32[24,1], index: 2, kind: input, shape index: {}]
  %s3 = inlined_call_operand.vmem [shape: f32[24,1], index: 3, kind: input, shape index: {}]
  %s4 = inlined_call_operand.vmem [shape: f32[56,24], index: 4, kind: input, shape index: {}]
  %s5 = inlined_call_operand.vmem [shape: f32[56,1], index: 5, kind: input, shape index: {}]
  %s6 = inlined_call_operand.vmem [shape: f32[56,56], index: 6, kind: input, shape index: {}]
  %s7 = inlined_call_operand.vmem [shape: f32[56,1], index: 7, kind: input, shape index: {}]
  %s8 = inlined_call_operand.vmem [shape: f32[56,56], index: 8, kind: input, shape index: {}]
  %s9 = inlined_call_operand.vmem [shape: f32[56,1], index: 9, kind: input, shape index: {}]
  %s10 = inlined_call_operand.vmem [shape: f32[24,56], index: 10, kind: input, shape index: {}]
  %s11 = inlined_call_operand.vmem [shape: f32[24,1], index: 11, kind: input, shape index: {}]
  %s12 = inlined_call_operand.vmem [shape: f32[24,1], index: 12, kind: input, shape index: {}]
  %s13 = inlined_call_operand.<no memory space> [shape: f32[1,1], index: 13, kind: input, shape index: {}]
  %s14 = inlined_call_operand.hbm [shape: f32[1,256], index: 14, kind: output, shape index: {}]
  %s15 = sld [smem:[#allocation0]]
  $region66: #{tpu_custom_call.1} parent=0
    _
  %s17 = ssub.s32 1, %s15
  %s18 = scalar_select 0, %s17, %s15
  %v19 = vstv %s13
  %20 = vst [vmem:[#allocation2] sm:$0x1] %v19
  $region1: #{tpu_custom_call.1} parent=0
    #allocation3 [shape = 'u8[1024]{0}', space=vmem, size = 0x400, scoped, tag = 'output window, operand 0, single buffered']
    #allocation4 [shape = 's32[1]{0}', space=sflag, size = 0x4, scoped, tag = 'scoped memory for tpu_custom_call.1']
    %21 = vsyncpa [#allocation4], 0
    // Predicated region
    $region2: #{tpu_custom_call.1} parent=1 // pred_check
      _
    $region3: #{tpu_custom_call.1} parent=1 // pred_check_branch
      %23 = sbr.rel (0) target = $region5
    $region4: #{tpu_custom_call.1} parent=1 // pred_region
      _
    $region5: #{tpu_custom_call.1} parent=1 // pred_fallthru
      _
    // Predicated region
    $region6: #{tpu_custom_call.1} parent=1 // pred_check
      _
    $region7: #{tpu_custom_call.1} parent=1 // pred_check_branch
      %25 = sbr.rel (0) target = $region9
    $region8: #{tpu_custom_call.1} parent=1 // pred_region
      _
    $region9: #{tpu_custom_call.1} parent=1 // pred_fallthru
      _
    // Predicated region
    $region10: #{tpu_custom_call.1} parent=1 // pred_check
      _
    $region11: #{tpu_custom_call.1} parent=1 // pred_check_branch
      %27 = sbr.rel (0) target = $region13
    $region12: #{tpu_custom_call.1} parent=1 // pred_region
      _
    $region13: #{tpu_custom_call.1} parent=1 // pred_fallthru
      _
    // Predicated region
    $region14: #{tpu_custom_call.1} parent=1 // pred_check
      _
    $region15: #{tpu_custom_call.1} parent=1 // pred_check_branch
      %29 = sbr.rel (0) target = $region17
    $region16: #{tpu_custom_call.1} parent=1 // pred_region
      _
    $region17: #{tpu_custom_call.1} parent=1 // pred_fallthru
      _
    // Predicated region
    $region18: #{tpu_custom_call.1} parent=1 // pred_check
      _
    $region19: #{tpu_custom_call.1} parent=1 // pred_check_branch
      %31 = sbr.rel (0) target = $region21
    $region20: #{tpu_custom_call.1} parent=1 // pred_region
      _
    $region21: #{tpu_custom_call.1} parent=1 // pred_fallthru
      _
    // Predicated region
    $region22: #{tpu_custom_call.1} parent=1 // pred_check
      _
    $region23: #{tpu_custom_call.1} parent=1 // pred_check_branch
      %33 = sbr.rel (0) target = $region25
    $region24: #{tpu_custom_call.1} parent=1 // pred_region
      _
    $region25: #{tpu_custom_call.1} parent=1 // pred_fallthru
      _
    // Predicated region
    $region26: #{tpu_custom_call.1} parent=1 // pred_check
      _
    $region27: #{tpu_custom_call.1} parent=1 // pred_check_branch
      %35 = sbr.rel (0) target = $region29
    $region28: #{tpu_custom_call.1} parent=1 // pred_region
      _
    $region29: #{tpu_custom_call.1} parent=1 // pred_fallthru
      _
    // Predicated region
    $region30: #{tpu_custom_call.1} parent=1 // pred_check
      _
    $region31: #{tpu_custom_call.1} parent=1 // pred_check_branch
      %37 = sbr.rel (0) target = $region33
    $region32: #{tpu_custom_call.1} parent=1 // pred_region
      _
    $region33: #{tpu_custom_call.1} parent=1 // pred_fallthru
      _
    // Predicated region
    $region34: #{tpu_custom_call.1} parent=1 // pred_check
      _
    $region35: #{tpu_custom_call.1} parent=1 // pred_check_branch
      %39 = sbr.rel (0) target = $region37
    $region36: #{tpu_custom_call.1} parent=1 // pred_region
      _
    $region37: #{tpu_custom_call.1} parent=1 // pred_fallthru
      _
    // Predicated region
    $region38: #{tpu_custom_call.1} parent=1 // pred_check
      _
    $region39: #{tpu_custom_call.1} parent=1 // pred_check_branch
      %41 = sbr.rel (0) target = $region41
    $region40: #{tpu_custom_call.1} parent=1 // pred_region
      _
    $region41: #{tpu_custom_call.1} parent=1 // pred_fallthru
      _
    // Predicated region
    $region42: #{tpu_custom_call.1} parent=1 // pred_check
      _
    $region43: #{tpu_custom_call.1} parent=1 // pred_check_branch
      %43 = sbr.rel (0) target = $region45
    $region44: #{tpu_custom_call.1} parent=1 // pred_region
      _
    $region45: #{tpu_custom_call.1} parent=1 // pred_fallthru
      _
    // Predicated region
    $region46: #{tpu_custom_call.1} parent=1 // pred_check
      _
    $region47: #{tpu_custom_call.1} parent=1 // pred_check_branch
      %45 = sbr.rel (0) target = $region49
    $region48: #{tpu_custom_call.1} parent=1 // pred_region
      _
    $region49: #{tpu_custom_call.1} parent=1 // pred_fallthru
      _
    // Predicated region
    $region50: #{tpu_custom_call.1} parent=1 // pred_check
      _
    $region51: #{tpu_custom_call.1} parent=1 // pred_check_branch
      %47 = sbr.rel (0) target = $region53
    $region52: #{tpu_custom_call.1} parent=1 // pred_region
      _
    $region53: #{tpu_custom_call.1} parent=1 // pred_fallthru
      _
    // Predicated region
    $region54: #{tpu_custom_call.1} parent=1 // pred_check
      _
    $region55: #{tpu_custom_call.1} parent=1 // pred_check_branch
      %49 = sbr.rel (0) target = $region57
    $region56: #{tpu_custom_call.1} parent=1 // pred_region
      _
    $region57: #{tpu_custom_call.1} parent=1 // pred_fallthru
      _
    %v50 = vld [vmem:[%s1] sm:$0xff]
    %v51 = vld [vmem:[%s1 + $0x8] sm:$0xff]
    %v52 = vld [vmem:[%s1 + $0x10] sm:$0xff]
    %v53 = vld [vmem:[%s2] sm:$0xff]
    %v54 = vld [vmem:[%s2 + $0x8] sm:$0xff]
    %v55 = vld [vmem:[%s2 + $0x10] sm:$0xff]
    %v56 = vld [vmem:[%s3] sm:$0xff]
    %v57 = vld [vmem:[%s3 + $0x8] sm:$0xff]
    %v58 = vld [vmem:[%s3 + $0x10] sm:$0xff]
    %v59 = vld [vmem:[%s4] sm:$0xff]
    %v60 = vld [vmem:[%s4 + $0x8] sm:$0xff]
    %v61 = vld [vmem:[%s4 + $0x10] sm:$0xff]
    %v62 = vld [vmem:[%s4 + $0x18] sm:$0xff]
    %v63 = vld [vmem:[%s4 + $0x20] sm:$0xff]
    %v64 = vld [vmem:[%s4 + $0x28] sm:$0xff]
    %v65 = vld [vmem:[%s4 + $0x30] sm:$0xff]
    %v66 = vld [vmem:[%s5] sm:$0xff]
    %v67 = vld [vmem:[%s5 + $0x8] sm:$0xff]
    %v68 = vld [vmem:[%s5 + $0x10] sm:$0xff]
    %v69 = vld [vmem:[%s5 + $0x18] sm:$0xff]
    %v70 = vld [vmem:[%s5 + $0x20] sm:$0xff]
    %v71 = vld [vmem:[%s5 + $0x28] sm:$0xff]
    %v72 = vld [vmem:[%s5 + $0x30] sm:$0xff]
    %v73 = vld [vmem:[%s6] sm:$0xff]
    %v74 = vld [vmem:[%s6 + $0x8] sm:$0xff]
    %v75 = vld [vmem:[%s6 + $0x10] sm:$0xff]
    %v76 = vld [vmem:[%s6 + $0x18] sm:$0xff]
    %v77 = vld [vmem:[%s6 + $0x20] sm:$0xff]
    %v78 = vld [vmem:[%s6 + $0x28] sm:$0xff]
    %v79 = vld [vmem:[%s6 + $0x30] sm:$0xff]
    %v80 = vld [vmem:[%s7] sm:$0xff]
    %v81 = vld [vmem:[%s7 + $0x8] sm:$0xff]
    %v82 = vld [vmem:[%s7 + $0x10] sm:$0xff]
    %v83 = vld [vmem:[%s7 + $0x18] sm:$0xff]
    %v84 = vld [vmem:[%s7 + $0x20] sm:$0xff]
    %v85 = vld [vmem:[%s7 + $0x28] sm:$0xff]
    %v86 = vld [vmem:[%s7 + $0x30] sm:$0xff]
    %v87 = vld [vmem:[%s8] sm:$0xff]
    %v88 = vld [vmem:[%s8 + $0x8] sm:$0xff]
    %v89 = vld [vmem:[%s8 + $0x10] sm:$0xff]
    %v90 = vld [vmem:[%s8 + $0x18] sm:$0xff]
    %v91 = vld [vmem:[%s8 + $0x20] sm:$0xff]
    %v92 = vld [vmem:[%s8 + $0x28] sm:$0xff]
    %v93 = vld [vmem:[%s8 + $0x30] sm:$0xff]
    %v94 = vld [vmem:[%s9] sm:$0xff]
    %v95 = vld [vmem:[%s9 + $0x8] sm:$0xff]
    %v96 = vld [vmem:[%s9 + $0x10] sm:$0xff]
    %v97 = vld [vmem:[%s9 + $0x18] sm:$0xff]
    %v98 = vld [vmem:[%s9 + $0x20] sm:$0xff]
    %v99 = vld [vmem:[%s9 + $0x28] sm:$0xff]
    %v100 = vld [vmem:[%s9 + $0x30] sm:$0xff]
    %v101 = vld [vmem:[%s10] sm:$0xff]
    %v102 = vld [vmem:[%s10 + $0x8] sm:$0xff]
    %v103 = vld [vmem:[%s10 + $0x10] sm:$0xff]
    %v104 = vld [vmem:[%s11] sm:$0xff]
    %v105 = vld [vmem:[%s11 + $0x8] sm:$0xff]
    %v106 = vld [vmem:[%s11 + $0x10] sm:$0xff]
    %v107 = vld [vmem:[%s12] sm:$0xff]
    %v108 = vld [vmem:[%s12 + $0x8] sm:$0xff]
    %v109 = vld [vmem:[%s12 + $0x10] sm:$0xff]
    %v110 = vld [vmem:[#allocation2] sm:$0x1]
    %v111 = vld [vmem:[%s0] ss:$2 sm:$0x3]
    %s112 = scalar_lea.vmem %s0, 1
    %v113 = vld [vmem:[%s112] ss:$2 sm:$0x3]
    %115 = vset.pattern.permute.xlu0 0
    %116 = vperm.xlu0 %115, %v50
    %v117 = vpop.permute.xlu0 %116
    %120 = vset.pattern.permute.xlu0 0
    %121 = vperm.xlu0 %120, %v51
    %v122 = vpop.permute.xlu0 %121
    %125 = vset.pattern.permute.xlu0 0
    %126 = vperm.xlu0 %125, %v52
    %v127 = vpop.permute.xlu0 %126
    %v130 = vlaneseq
    %v131 = vshrl.u32 %v130, 7
    %v132 = vsub.s32 0, %v131
    %v133 = vrot.slane %v111, %v132
    %v134 = vlaneseq
    %v135 = vshrl.u32 %v134, 7
    %v136 = vsub.s32 1, %v135
    %v137 = vrot.slane %v111, %v136
    %v140 = vmul.f32 %v117, %v133
    %v141 = vmul.f32 %v117, %v137
    %v142 = vmul.f32 %v122, %v133
    %v143 = vmul.f32 %v122, %v137
    %v144 = vmul.f32 %v127, %v133
    %v145 = vmul.f32 %v127, %v137
    %147 = vset.pattern.permute.xlu0 0
    %148 = vperm.xlu0 %147, %v53
    %v149 = vpop.permute.xlu0 %148
    %152 = vset.pattern.permute.xlu0 0
    %153 = vperm.xlu0 %152, %v54
    %v154 = vpop.permute.xlu0 %153
    %157 = vset.pattern.permute.xlu0 0
    %158 = vperm.xlu0 %157, %v55
    %v159 = vpop.permute.xlu0 %158
    %v162 = vlaneseq
    %v163 = vshrl.u32 %v162, 7
    %v164 = vsub.s32 0, %v163
    %v165 = vrot.slane %v113, %v164
    %v166 = vlaneseq
    %v167 = vshrl.u32 %v166, 7
    %v168 = vsub.s32 1, %v167
    %v169 = vrot.slane %v113, %v168
    %v172 = vmul.f32 %v149, %v165
    %v173 = vmul.f32 %v149, %v169
    %v174 = vmul.f32 %v154, %v165
    %v175 = vmul.f32 %v154, %v169
    %v176 = vmul.f32 %v159, %v165
    %v177 = vmul.f32 %v159, %v169
    %v178 = vadd.f32 %v140, %v172
    %v179 = vadd.f32 %v141, %v173
    %v180 = vadd.f32 %v142, %v174
    %v181 = vadd.f32 %v143, %v175
    %v182 = vadd.f32 %v144, %v176
    %v183 = vadd.f32 %v145, %v177
    %185 = vset.pattern.permute.xlu0 0
    %186 = vperm.xlu0 %185, %v56
    %v187 = vpop.permute.xlu0 %186
    %190 = vset.pattern.permute.xlu0 0
    %191 = vperm.xlu0 %190, %v57
    %v192 = vpop.permute.xlu0 %191
    %195 = vset.pattern.permute.xlu0 0
    %196 = vperm.xlu0 %195, %v58
    %v197 = vpop.permute.xlu0 %196
    %v199 = vadd.f32 %v178, %v187
    %v200 = vadd.f32 %v179, %v187
    %v201 = vadd.f32 %v180, %v192
    %v202 = vadd.f32 %v181, %v192
    %v203 = vadd.f32 %v182, %v197
    %v204 = vadd.f32 %v183, %v197
    %v205 = vtanh.pop %v199
    %v206 = vtanh.pop %v200
    %v207 = vtanh.pop %v201
    %v208 = vtanh.pop %v202
    %v209 = vtanh.pop %v203
    %v210 = vtanh.pop %v204
    %212 = vset.pattern.permute.xlu0 0
    %213 = vperm.xlu0 %212, %v66
    %v214 = vpop.permute.xlu0 %213
    %217 = vset.pattern.permute.xlu0 0
    %218 = vperm.xlu0 %217, %v67
    %v219 = vpop.permute.xlu0 %218
    %222 = vset.pattern.permute.xlu0 0
    %223 = vperm.xlu0 %222, %v68
    %v224 = vpop.permute.xlu0 %223
    %227 = vset.pattern.permute.xlu0 0
    %228 = vperm.xlu0 %227, %v69
    %v229 = vpop.permute.xlu0 %228
    %232 = vset.pattern.permute.xlu0 0
    %233 = vperm.xlu0 %232, %v70
    %v234 = vpop.permute.xlu0 %233
    %237 = vset.pattern.permute.xlu0 0
    %238 = vperm.xlu0 %237, %v71
    %v239 = vpop.permute.xlu0 %238
    %242 = vset.pattern.permute.xlu0 0
    %243 = vperm.xlu0 %242, %v72
    %v244 = vpop.permute.xlu0 %243
    %vm246 = vcmask 195584
    %v248 = vsel %vm246, %v59, 0
    %v251 = vsel %vm246, %v60, 0
    %v254 = vsel %vm246, %v61, 0
    %v257 = vsel %vm246, %v62, 0
    %v260 = vsel %vm246, %v63, 0
    %v263 = vsel %vm246, %v64, 0
    %v266 = vsel %vm246, %v65, 0
    %268 = vmatprep.subr.mxu0 %v206
    %269 = vmatpush1.msra.mxu0 %v205
    %270 = vmatprep.subr.mxu0 %v208
    %271 = vmatpush1.msra.mxu0 %v207
    %272 = vmatprep.subr.mxu0 %v210
    %273 = vmatpush1.msra.mxu0 %v209
    %274 = vmatprep.subr.mxu0 0.0
    %275 = vmatpush1.msra.mxu0 0.0
    %276 = vmatprep.subr.mxu0 0.0
    %277 = vmatpush1.msra.mxu0 0.0
    %278 = vmatprep.subr.mxu0 0.0
    %279 = vmatpush1.msra.mxu0 0.0
    %280 = vmatprep.subr.mxu0 0.0
    %281 = vmatpush1.msra.mxu0 0.0
    %282 = vmatprep.subr.mxu0 0.0
    %283 = vmatpush1.msra.mxu0 0.0
    %284 = vmatprep.subr.mxu0 0.0
    %285 = vmatpush1.msra.mxu0 0.0
    %286 = vmatprep.subr.mxu0 0.0
    %287 = vmatpush1.msra.mxu0 0.0
    %288 = vmatprep.subr.mxu0 0.0
    %289 = vmatpush1.msra.mxu0 0.0
    %290 = vmatprep.subr.mxu0 0.0
    %291 = vmatpush1.msra.mxu0 0.0
    %292 = vmatprep.subr.mxu0 0.0
    %293 = vmatpush1.msra.mxu0 0.0
    %294 = vmatprep.subr.mxu0 0.0
    %295 = vmatpush1.msra.mxu0 0.0
    %296 = vmatprep.subr.mxu0 0.0
    %297 = vmatpush1.msra.mxu0 0.0
    %298 = vmatprep.subr.mxu0 0.0
    %299 = vmatpush1.msra.mxu0 0.0
    %300 = vmatprep.subr.mxu0 0.0
    %301 = vmatpush1.msra.mxu0 0.0
    %302 = vmatprep.subr.mxu0 0.0
    %303 = vmatpush1.msra.mxu0 0.0
    %304 = vmatprep.subr.mxu0 0.0
    %305 = vmatpush1.msra.mxu0 0.0
    %306 = vmatprep.subr.mxu0 0.0
    %307 = vmatpush1.msra.mxu0 0.0
    %308 = vmatprep.subr.mxu0 0.0
    %309 = vmatpush1.msra.mxu0 0.0
    %310 = vmatprep.subr.mxu0 0.0
    %311 = vmatpush1.msra.mxu0 0.0
    %312 = vmatprep.subr.mxu0 0.0
    %313 = vmatpush1.msra.mxu0 0.0
    %314 = vmatprep.subr.mxu0 0.0
    %315 = vmatpush1.msra.mxu0 0.0
    %316 = vmatprep.subr.mxu0 0.0
    %317 = vmatpush1.msra.mxu0 0.0
    %318 = vmatprep.subr.mxu0 0.0
    %319 = vmatpush1.msra.mxu0 0.0
    %320 = vmatprep.subr.mxu0 0.0
    %321 = vmatpush1.msra.mxu0 0.0
    %322 = vmatprep.subr.mxu0 0.0
    %323 = vmatpush1.msra.mxu0 0.0
    %324 = vmatprep.subr.mxu0 0.0
    %325 = vmatpush1.msra.mxu0 0.0
    %326 = vmatprep.subr.mxu0 0.0
    %327 = vmatpush1.msra.mxu0 0.0
    %328 = vmatprep.subr.mxu0 0.0
    %329 = vmatpush1.msra.mxu0 0.0
    %330 = vmatprep.subr.mxu0 0.0
    %331 = vmatpush1.msra.mxu0 0.0
    %332 = vmatprep.mubr.f32.mxu0 0.0
    %333 = vmatmul.mubr.f32.gmra.mrb[0].mxu0 %v248
    %v334 = vpop.f32.mrb[0].mxu0
    %v335 = vadd.f32 %v214, %v334
    %v336 = vpop.f32.mrb[0].mxu0
    %v337 = vadd.f32 %v214, %v336
    %338 = vmatprep.mubr.f32.mxu0 0.0
    %339 = vmatmul.mubr.f32.gmra.mrb[0].mxu0 %v251
    %v340 = vpop.f32.mrb[0].mxu0
    %v341 = vadd.f32 %v219, %v340
    %v342 = vpop.f32.mrb[0].mxu0
    %v343 = vadd.f32 %v219, %v342
    %344 = vmatprep.mubr.f32.mxu0 0.0
    %345 = vmatmul.mubr.f32.gmra.mrb[0].mxu0 %v254
    %v346 = vpop.f32.mrb[0].mxu0
    %v347 = vadd.f32 %v224, %v346
    %v348 = vpop.f32.mrb[0].mxu0
    %v349 = vadd.f32 %v224, %v348
    %350 = vmatprep.mubr.f32.mxu0 0.0
    %351 = vmatmul.mubr.f32.gmra.mrb[0].mxu0 %v257
    %v352 = vpop.f32.mrb[0].mxu0
    %v353 = vadd.f32 %v229, %v352
    %v354 = vpop.f32.mrb[0].mxu0
    %v355 = vadd.f32 %v229, %v354
    %356 = vmatprep.mubr.f32.mxu0 0.0
    %357 = vmatmul.mubr.f32.gmra.mrb[0].mxu0 %v260
    %v358 = vpop.f32.mrb[0].mxu0
    %v359 = vadd.f32 %v234, %v358
    %v360 = vpop.f32.mrb[0].mxu0
    %v361 = vadd.f32 %v234, %v360
    %362 = vmatprep.mubr.f32.mxu0 0.0
    %363 = vmatmul.mubr.f32.gmra.mrb[0].mxu0 %v263
    %v364 = vpop.f32.mrb[0].mxu0
    %v365 = vadd.f32 %v239, %v364
    %v366 = vpop.f32.mrb[0].mxu0
    %v367 = vadd.f32 %v239, %v366
    %368 = vmatprep.mubr.f32.mxu0 0.0
    %369 = vmatmul.mubr.f32.gmra.mrb[0].mxu0 %v266
    %v370 = vpop.f32.mrb[0].mxu0
    %v371 = vadd.f32 %v244, %v370
    %v372 = vpop.f32.mrb[0].mxu0
    %v373 = vadd.f32 %v244, %v372
    %374 = vdwg.mxu0
    %v375 = vtanh.pop %v335
    %v376 = vtanh.pop %v337
    %v377 = vtanh.pop %v341
    %v378 = vtanh.pop %v343
    %v379 = vtanh.pop %v347
    %v380 = vtanh.pop %v349
    %v381 = vtanh.pop %v353
    %v382 = vtanh.pop %v355
    %v383 = vtanh.pop %v359
    %v384 = vtanh.pop %v361
    %v385 = vtanh.pop %v365
    %v386 = vtanh.pop %v367
    %v387 = vtanh.pop %v371
    %v388 = vtanh.pop %v373
    %390 = vset.pattern.permute.xlu0 0
    %391 = vperm.xlu0 %390, %v80
    %v392 = vpop.permute.xlu0 %391
    %395 = vset.pattern.permute.xlu0 0
    %396 = vperm.xlu0 %395, %v81
    %v397 = vpop.permute.xlu0 %396
    %400 = vset.pattern.permute.xlu0 0
    %401 = vperm.xlu0 %400, %v82
    %v402 = vpop.permute.xlu0 %401
    %405 = vset.pattern.permute.xlu0 0
    %406 = vperm.xlu0 %405, %v83
    %v407 = vpop.permute.xlu0 %406
    %410 = vset.pattern.permute.xlu0 0
    %411 = vperm.xlu0 %410, %v84
    %v412 = vpop.permute.xlu0 %411
    %415 = vset.pattern.permute.xlu0 0
    %416 = vperm.xlu0 %415, %v85
    %v417 = vpop.permute.xlu0 %416
    %420 = vset.pattern.permute.xlu0 0
    %421 = vperm.xlu0 %420, %v86
    %v422 = vpop.permute.xlu0 %421
    %vm424 = vcmask 457728
    %v426 = vsel %vm424, %v73, 0
    %v429 = vsel %vm424, %v74, 0
    %v432 = vsel %vm424, %v75, 0
    %v435 = vsel %vm424, %v76, 0
    %v438 = vsel %vm424, %v77, 0
    %v441 = vsel %vm424, %v78, 0
    %v444 = vsel %vm424, %v79, 0
    %446 = vmatprep.subr.mxu0 %v376
    %447 = vmatpush1.msra.mxu0 %v375
    %448 = vmatprep.subr.mxu0 %v378
    %449 = vmatpush1.msra.mxu0 %v377
    %450 = vmatprep.subr.mxu0 %v380
    %451 = vmatpush1.msra.mxu0 %v379
    %452 = vmatprep.subr.mxu0 %v382
    %453 = vmatpush1.msra.mxu0 %v381
    %454 = vmatprep.subr.mxu0 %v384
    %455 = vmatpush1.msra.mxu0 %v383
    %456 = vmatprep.subr.mxu0 %v386
    %457 = vmatpush1.msra.mxu0 %v385
    %458 = vmatprep.subr.mxu0 %v388
    %459 = vmatpush1.msra.mxu0 %v387
    %460 = vmatprep.subr.mxu0 0.0
    %461 = vmatpush1.msra.mxu0 0.0
    %462 = vmatprep.subr.mxu0 0.0
    %463 = vmatpush1.msra.mxu0 0.0
    %464 = vmatprep.subr.mxu0 0.0
    %465 = vmatpush1.msra.mxu0 0.0
    %466 = vmatprep.subr.mxu0 0.0
    %467 = vmatpush1.msra.mxu0 0.0
    %468 = vmatprep.subr.mxu0 0.0
    %469 = vmatpush1.msra.mxu0 0.0
    %470 = vmatprep.subr.mxu0 0.0
    %471 = vmatpush1.msra.mxu0 0.0
    %472 = vmatprep.subr.mxu0 0.0
    %473 = vmatpush1.msra.mxu0 0.0
    %474 = vmatprep.subr.mxu0 0.0
    %475 = vmatpush1.msra.mxu0 0.0
    %476 = vmatprep.subr.mxu0 0.0
    %477 = vmatpush1.msra.mxu0 0.0
    %478 = vmatprep.subr.mxu0 0.0
    %479 = vmatpush1.msra.mxu0 0.0
    %480 = vmatprep.subr.mxu0 0.0
    %481 = vmatpush1.msra.mxu0 0.0
    %482 = vmatprep.subr.mxu0 0.0
    %483 = vmatpush1.msra.mxu0 0.0
    %484 = vmatprep.subr.mxu0 0.0
    %485 = vmatpush1.msra.mxu0 0.0
    %486 = vmatprep.subr.mxu0 0.0
    %487 = vmatpush1.msra.mxu0 0.0
    %488 = vmatprep.subr.mxu0 0.0
    %489 = vmatpush1.msra.mxu0 0.0
    %490 = vmatprep.subr.mxu0 0.0
    %491 = vmatpush1.msra.mxu0 0.0
    %492 = vmatprep.subr.mxu0 0.0
    %493 = vmatpush1.msra.mxu0 0.0
    %494 = vmatprep.subr.mxu0 0.0
    %495 = vmatpush1.msra.mxu0 0.0
    %496 = vmatprep.subr.mxu0 0.0
    %497 = vmatpush1.msra.mxu0 0.0
    %498 = vmatprep.subr.mxu0 0.0
    %499 = vmatpush1.msra.mxu0 0.0
    %500 = vmatprep.subr.mxu0 0.0
    %501 = vmatpush1.msra.mxu0 0.0
    %502 = vmatprep.subr.mxu0 0.0
    %503 = vmatpush1.msra.mxu0 0.0
    %504 = vmatprep.subr.mxu0 0.0
    %505 = vmatpush1.msra.mxu0 0.0
    %506 = vmatprep.subr.mxu0 0.0
    %507 = vmatpush1.msra.mxu0 0.0
    %508 = vmatprep.subr.mxu0 0.0
    %509 = vmatpush1.msra.mxu0 0.0
    %510 = vmatprep.mubr.f32.mxu0 0.0
    %511 = vmatmul.mubr.f32.gmra.mrb[0].mxu0 %v426
    %v512 = vpop.f32.mrb[0].mxu0
    %v513 = vadd.f32 %v392, %v512
    %v514 = vpop.f32.mrb[0].mxu0
    %v515 = vadd.f32 %v392, %v514
    %516 = vmatprep.mubr.f32.mxu0 0.0
    %517 = vmatmul.mubr.f32.gmra.mrb[0].mxu0 %v429
    %v518 = vpop.f32.mrb[0].mxu0
    %v519 = vadd.f32 %v397, %v518
    %v520 = vpop.f32.mrb[0].mxu0
    %v521 = vadd.f32 %v397, %v520
    %522 = vmatprep.mubr.f32.mxu0 0.0
    %523 = vmatmul.mubr.f32.gmra.mrb[0].mxu0 %v432
    %v524 = vpop.f32.mrb[0].mxu0
    %v525 = vadd.f32 %v402, %v524
    %v526 = vpop.f32.mrb[0].mxu0
    %v527 = vadd.f32 %v402, %v526
    %528 = vmatprep.mubr.f32.mxu0 0.0
    %529 = vmatmul.mubr.f32.gmra.mrb[0].mxu0 %v435
    %v530 = vpop.f32.mrb[0].mxu0
    %v531 = vadd.f32 %v407, %v530
    %v532 = vpop.f32.mrb[0].mxu0
    %v533 = vadd.f32 %v407, %v532
    %534 = vmatprep.mubr.f32.mxu0 0.0
    %535 = vmatmul.mubr.f32.gmra.mrb[0].mxu0 %v438
    %v536 = vpop.f32.mrb[0].mxu0
    %v537 = vadd.f32 %v412, %v536
    %v538 = vpop.f32.mrb[0].mxu0
    %v539 = vadd.f32 %v412, %v538
    %540 = vmatprep.mubr.f32.mxu0 0.0
    %541 = vmatmul.mubr.f32.gmra.mrb[0].mxu0 %v441
    %v542 = vpop.f32.mrb[0].mxu0
    %v543 = vadd.f32 %v417, %v542
    %v544 = vpop.f32.mrb[0].mxu0
    %v545 = vadd.f32 %v417, %v544
    %546 = vmatprep.mubr.f32.mxu0 0.0
    %547 = vmatmul.mubr.f32.gmra.mrb[0].mxu0 %v444
    %v548 = vpop.f32.mrb[0].mxu0
    %v549 = vadd.f32 %v422, %v548
    %v550 = vpop.f32.mrb[0].mxu0
    %v551 = vadd.f32 %v422, %v550
    %552 = vdwg.mxu0
    %v553 = vtanh.pop %v513
    %v554 = vtanh.pop %v515
    %v555 = vtanh.pop %v519
    %v556 = vtanh.pop %v521
    %v557 = vtanh.pop %v525
    %v558 = vtanh.pop %v527
    %v559 = vtanh.pop %v531
    %v560 = vtanh.pop %v533
    %v561 = vtanh.pop %v537
    %v562 = vtanh.pop %v539
    %v563 = vtanh.pop %v543
    %v564 = vtanh.pop %v545
    %v565 = vtanh.pop %v549
    %v566 = vtanh.pop %v551
    %568 = vset.pattern.permute.xlu0 0
    %569 = vperm.xlu0 %568, %v94
    %v570 = vpop.permute.xlu0 %569
    %573 = vset.pattern.permute.xlu0 0
    %574 = vperm.xlu0 %573, %v95
    %v575 = vpop.permute.xlu0 %574
    %578 = vset.pattern.permute.xlu0 0
    %579 = vperm.xlu0 %578, %v96
    %v580 = vpop.permute.xlu0 %579
    %583 = vset.pattern.permute.xlu0 0
    %584 = vperm.xlu0 %583, %v97
    %v585 = vpop.permute.xlu0 %584
    %588 = vset.pattern.permute.xlu0 0
    %589 = vperm.xlu0 %588, %v98
    %v590 = vpop.permute.xlu0 %589
    %593 = vset.pattern.permute.xlu0 0
    %594 = vperm.xlu0 %593, %v99
    %v595 = vpop.permute.xlu0 %594
    %598 = vset.pattern.permute.xlu0 0
    %599 = vperm.xlu0 %598, %v100
    %v600 = vpop.permute.xlu0 %599
    %v603 = vsel %vm424, %v87, 0
    %v606 = vsel %vm424, %v88, 0
    %v609 = vsel %vm424, %v89, 0
    %v612 = vsel %vm424, %v90, 0
    %v615 = vsel %vm424, %v91, 0
    %v618 = vsel %vm424, %v92, 0
    %v621 = vsel %vm424, %v93, 0
    %623 = vmatprep.subr.mxu0 %v554
    %624 = vmatpush1.msra.mxu0 %v553
    %625 = vmatprep.subr.mxu0 %v556
    %626 = vmatpush1.msra.mxu0 %v555
    %627 = vmatprep.subr.mxu0 %v558
    %628 = vmatpush1.msra.mxu0 %v557
    %629 = vmatprep.subr.mxu0 %v560
    %630 = vmatpush1.msra.mxu0 %v559
    %631 = vmatprep.subr.mxu0 %v562
    %632 = vmatpush1.msra.mxu0 %v561
    %633 = vmatprep.subr.mxu0 %v564
    %634 = vmatpush1.msra.mxu0 %v563
    %635 = vmatprep.subr.mxu0 %v566
    %636 = vmatpush1.msra.mxu0 %v565
    %637 = vmatprep.subr.mxu0 0.0
    %638 = vmatpush1.msra.mxu0 0.0
    %639 = vmatprep.subr.mxu0 0.0
    %640 = vmatpush1.msra.mxu0 0.0
    %641 = vmatprep.subr.mxu0 0.0
    %642 = vmatpush1.msra.mxu0 0.0
    %643 = vmatprep.subr.mxu0 0.0
    %644 = vmatpush1.msra.mxu0 0.0
    %645 = vmatprep.subr.mxu0 0.0
    %646 = vmatpush1.msra.mxu0 0.0
    %647 = vmatprep.subr.mxu0 0.0
    %648 = vmatpush1.msra.mxu0 0.0
    %649 = vmatprep.subr.mxu0 0.0
    %650 = vmatpush1.msra.mxu0 0.0
    %651 = vmatprep.subr.mxu0 0.0
    %652 = vmatpush1.msra.mxu0 0.0
    %653 = vmatprep.subr.mxu0 0.0
    %654 = vmatpush1.msra.mxu0 0.0
    %655 = vmatprep.subr.mxu0 0.0
    %656 = vmatpush1.msra.mxu0 0.0
    %657 = vmatprep.subr.mxu0 0.0
    %658 = vmatpush1.msra.mxu0 0.0
    %659 = vmatprep.subr.mxu0 0.0
    %660 = vmatpush1.msra.mxu0 0.0
    %661 = vmatprep.subr.mxu0 0.0
    %662 = vmatpush1.msra.mxu0 0.0
    %663 = vmatprep.subr.mxu0 0.0
    %664 = vmatpush1.msra.mxu0 0.0
    %665 = vmatprep.subr.mxu0 0.0
    %666 = vmatpush1.msra.mxu0 0.0
    %667 = vmatprep.subr.mxu0 0.0
    %668 = vmatpush1.msra.mxu0 0.0
    %669 = vmatprep.subr.mxu0 0.0
    %670 = vmatpush1.msra.mxu0 0.0
    %671 = vmatprep.subr.mxu0 0.0
    %672 = vmatpush1.msra.mxu0 0.0
    %673 = vmatprep.subr.mxu0 0.0
    %674 = vmatpush1.msra.mxu0 0.0
    %675 = vmatprep.subr.mxu0 0.0
    %676 = vmatpush1.msra.mxu0 0.0
    %677 = vmatprep.subr.mxu0 0.0
    %678 = vmatpush1.msra.mxu0 0.0
    %679 = vmatprep.subr.mxu0 0.0
    %680 = vmatpush1.msra.mxu0 0.0
    %681 = vmatprep.subr.mxu0 0.0
    %682 = vmatpush1.msra.mxu0 0.0
    %683 = vmatprep.subr.mxu0 0.0
    %684 = vmatpush1.msra.mxu0 0.0
    %685 = vmatprep.subr.mxu0 0.0
    %686 = vmatpush1.msra.mxu0 0.0
    %687 = vmatprep.mubr.f32.mxu0 0.0
    %688 = vmatmul.mubr.f32.gmra.mrb[0].mxu0 %v603
    %v689 = vpop.f32.mrb[0].mxu0
    %v690 = vadd.f32 %v570, %v689
    %v691 = vpop.f32.mrb[0].mxu0
    %v692 = vadd.f32 %v570, %v691
    %693 = vmatprep.mubr.f32.mxu0 0.0
    %694 = vmatmul.mubr.f32.gmra.mrb[0].mxu0 %v606
    %v695 = vpop.f32.mrb[0].mxu0
    %v696 = vadd.f32 %v575, %v695
    %v697 = vpop.f32.mrb[0].mxu0
    %v698 = vadd.f32 %v575, %v697
    %699 = vmatprep.mubr.f32.mxu0 0.0
    %700 = vmatmul.mubr.f32.gmra.mrb[0].mxu0 %v609
    %v701 = vpop.f32.mrb[0].mxu0
    %v702 = vadd.f32 %v580, %v701
    %v703 = vpop.f32.mrb[0].mxu0
    %v704 = vadd.f32 %v580, %v703
    %705 = vmatprep.mubr.f32.mxu0 0.0
    %706 = vmatmul.mubr.f32.gmra.mrb[0].mxu0 %v612
    %v707 = vpop.f32.mrb[0].mxu0
    %v708 = vadd.f32 %v585, %v707
    %v709 = vpop.f32.mrb[0].mxu0
    %v710 = vadd.f32 %v585, %v709
    %711 = vmatprep.mubr.f32.mxu0 0.0
    %712 = vmatmul.mubr.f32.gmra.mrb[0].mxu0 %v615
    %v713 = vpop.f32.mrb[0].mxu0
    %v714 = vadd.f32 %v590, %v713
    %v715 = vpop.f32.mrb[0].mxu0
    %v716 = vadd.f32 %v590, %v715
    %717 = vmatprep.mubr.f32.mxu0 0.0
    %718 = vmatmul.mubr.f32.gmra.mrb[0].mxu0 %v618
    %v719 = vpop.f32.mrb[0].mxu0
    %v720 = vadd.f32 %v595, %v719
    %v721 = vpop.f32.mrb[0].mxu0
    %v722 = vadd.f32 %v595, %v721
    %723 = vmatprep.mubr.f32.mxu0 0.0
    %724 = vmatmul.mubr.f32.gmra.mrb[0].mxu0 %v621
    %v725 = vpop.f32.mrb[0].mxu0
    %v726 = vadd.f32 %v600, %v725
    %v727 = vpop.f32.mrb[0].mxu0
    %v728 = vadd.f32 %v600, %v727
    %729 = vdwg.mxu0
    %v730 = vtanh.pop %v690
    %v731 = vtanh.pop %v692
    %v732 = vtanh.pop %v696
    %v733 = vtanh.pop %v698
    %v734 = vtanh.pop %v702
    %v735 = vtanh.pop %v704
    %v736 = vtanh.pop %v708
    %v737 = vtanh.pop %v710
    %v738 = vtanh.pop %v714
    %v739 = vtanh.pop %v716
    %v740 = vtanh.pop %v720
    %v741 = vtanh.pop %v722
    %v742 = vtanh.pop %v726
    %v743 = vtanh.pop %v728
    %745 = vset.pattern.permute.xlu0 0
    %746 = vperm.xlu0 %745, %v104
    %v747 = vpop.permute.xlu0 %746
    %750 = vset.pattern.permute.xlu0 0
    %751 = vperm.xlu0 %750, %v105
    %v752 = vpop.permute.xlu0 %751
    %755 = vset.pattern.permute.xlu0 0
    %756 = vperm.xlu0 %755, %v106
    %v757 = vpop.permute.xlu0 %756
    %v760 = vsel %vm424, %v101, 0
    %v763 = vsel %vm424, %v102, 0
    %v766 = vsel %vm424, %v103, 0
    %768 = vmatprep.subr.mxu0 %v731
    %769 = vmatpush1.msra.mxu0 %v730
    %770 = vmatprep.subr.mxu0 %v733
    %771 = vmatpush1.msra.mxu0 %v732
    %772 = vmatprep.subr.mxu0 %v735
    %773 = vmatpush1.msra.mxu0 %v734
    %774 = vmatprep.subr.mxu0 %v737
    %775 = vmatpush1.msra.mxu0 %v736
    %776 = vmatprep.subr.mxu0 %v739
    %777 = vmatpush1.msra.mxu0 %v738
    %778 = vmatprep.subr.mxu0 %v741
    %779 = vmatpush1.msra.mxu0 %v740
    %780 = vmatprep.subr.mxu0 %v743
    %781 = vmatpush1.msra.mxu0 %v742
    %782 = vmatprep.subr.mxu0 0.0
    %783 = vmatpush1.msra.mxu0 0.0
    %784 = vmatprep.subr.mxu0 0.0
    %785 = vmatpush1.msra.mxu0 0.0
    %786 = vmatprep.subr.mxu0 0.0
    %787 = vmatpush1.msra.mxu0 0.0
    %788 = vmatprep.subr.mxu0 0.0
    %789 = vmatpush1.msra.mxu0 0.0
    %790 = vmatprep.subr.mxu0 0.0
    %791 = vmatpush1.msra.mxu0 0.0
    %792 = vmatprep.subr.mxu0 0.0
    %793 = vmatpush1.msra.mxu0 0.0
    %794 = vmatprep.subr.mxu0 0.0
    %795 = vmatpush1.msra.mxu0 0.0
    %796 = vmatprep.subr.mxu0 0.0
    %797 = vmatpush1.msra.mxu0 0.0
    %798 = vmatprep.subr.mxu0 0.0
    %799 = vmatpush1.msra.mxu0 0.0
    %800 = vmatprep.subr.mxu0 0.0
    %801 = vmatpush1.msra.mxu0 0.0
    %802 = vmatprep.subr.mxu0 0.0
    %803 = vmatpush1.msra.mxu0 0.0
    %804 = vmatprep.subr.mxu0 0.0
    %805 = vmatpush1.msra.mxu0 0.0
    %806 = vmatprep.subr.mxu0 0.0
    %807 = vmatpush1.msra.mxu0 0.0
    %808 = vmatprep.subr.mxu0 0.0
    %809 = vmatpush1.msra.mxu0 0.0
    %810 = vmatprep.subr.mxu0 0.0
    %811 = vmatpush1.msra.mxu0 0.0
    %812 = vmatprep.subr.mxu0 0.0
    %813 = vmatpush1.msra.mxu0 0.0
    %814 = vmatprep.subr.mxu0 0.0
    %815 = vmatpush1.msra.mxu0 0.0
    %816 = vmatprep.subr.mxu0 0.0
    %817 = vmatpush1.msra.mxu0 0.0
    %818 = vmatprep.subr.mxu0 0.0
    %819 = vmatpush1.msra.mxu0 0.0
    %820 = vmatprep.subr.mxu0 0.0
    %821 = vmatpush1.msra.mxu0 0.0
    %822 = vmatprep.subr.mxu0 0.0
    %823 = vmatpush1.msra.mxu0 0.0
    %824 = vmatprep.subr.mxu0 0.0
    %825 = vmatpush1.msra.mxu0 0.0
    %826 = vmatprep.subr.mxu0 0.0
    %827 = vmatpush1.msra.mxu0 0.0
    %828 = vmatprep.subr.mxu0 0.0
    %829 = vmatpush1.msra.mxu0 0.0
    %830 = vmatprep.subr.mxu0 0.0
    %831 = vmatpush1.msra.mxu0 0.0
    %832 = vmatprep.mubr.f32.mxu0 0.0
    %833 = vmatmul.mubr.f32.gmra.mrb[0].mxu0 %v760
    %v834 = vpop.f32.mrb[0].mxu0
    %v835 = vadd.f32 %v747, %v834
    %v836 = vpop.f32.mrb[0].mxu0
    %v837 = vadd.f32 %v747, %v836
    %838 = vmatprep.mubr.f32.mxu0 0.0
    %839 = vmatmul.mubr.f32.gmra.mrb[0].mxu0 %v763
    %v840 = vpop.f32.mrb[0].mxu0
    %v841 = vadd.f32 %v752, %v840
    %v842 = vpop.f32.mrb[0].mxu0
    %v843 = vadd.f32 %v752, %v842
    %844 = vmatprep.mubr.f32.mxu0 0.0
    %845 = vmatmul.mubr.f32.gmra.mrb[0].mxu0 %v766
    %v846 = vpop.f32.mrb[0].mxu0
    %v847 = vadd.f32 %v757, %v846
    %v848 = vpop.f32.mrb[0].mxu0
    %v849 = vadd.f32 %v757, %v848
    %850 = vdwg.mxu0
    %v851 = vtanh.pop %v835
    %v852 = vtanh.pop %v837
    %v853 = vtanh.pop %v841
    %v854 = vtanh.pop %v843
    %v855 = vtanh.pop %v847
    %v856 = vtanh.pop %v849
    %858 = vset.pattern.permute.xlu0 0
    %859 = vperm.xlu0 %858, %v107
    %v860 = vpop.permute.xlu0 %859
    %863 = vset.pattern.permute.xlu0 0
    %864 = vperm.xlu0 %863, %v108
    %v865 = vpop.permute.xlu0 %864
    %868 = vset.pattern.permute.xlu0 0
    %869 = vperm.xlu0 %868, %v109
    %v870 = vpop.permute.xlu0 %869
    %v872 = vmul.f32 %v860, %v851
    %v873 = vmul.f32 %v860, %v852
    %v874 = vmul.f32 %v865, %v853
    %v875 = vmul.f32 %v865, %v854
    %v876 = vmul.f32 %v870, %v855
    %v877 = vmul.f32 %v870, %v856
    %v878 = vadd.f32 %v872, %v874
    %v879 = vadd.f32 %v878, %v876
    %v880 = vrot.slane %v879, 4
    %v881 = vadd.f32 %v879, %v880
    %v882 = vrot.slane %v881, 2
    %v883 = vadd.f32 %v881, %v882
    %v884 = vrot.slane %v883, 1
    %v885 = vadd.f32 %v883, %v884
    %v886 = vadd.f32 %v873, %v875
    %v887 = vadd.f32 %v886, %v877
    %v888 = vrot.slane %v887, 4
    %v889 = vadd.f32 %v887, %v888
    %v890 = vrot.slane %v889, 2
    %v891 = vadd.f32 %v889, %v890
    %v892 = vrot.slane %v891, 1
    %v893 = vadd.f32 %v891, %v892
    %895 = vset.pattern.permute.xlu0 0
    %896 = vperm.xlu0 %895, %v110
    %v897 = vpop.permute.xlu0 %896
    %v899 = vlaneseq
    %v900 = vshrl.u32 %v899, 7
    %v901 = vsub.s32 0, %v900
    %v902 = vrot.slane %v897, %v901
    %v903 = vadd.f32 %v885, %v902
    %v904 = vadd.f32 %v893, %v902
    %v907 = vcombine.low %v903, %v904
    %v909 = vunpack.c.l.s4 1966171168
    %v910 = vunpack.c.0.s8 %v909
    %v911 = vlaneseq
    %v912 = vshrl.u32 %v911, 7
    %v913 = vsub.s32 %v910, %v912
    %v914 = vrot.slane %v907, %v913
    %v916 = vunpack.c.l.s4 1966171168
    %v917 = vunpack.c.0.s8 %v916
    %v918 = vlaneseq
    %v919 = vshrl.u32 %v918, 7
    %v920 = vsub.s32 %v917, %v919
    %v921 = vrot.slane %v914, %v920
    %v923 = vlaneseq
    %vm924 = vcmp.ge.s32.totalorder %v923, 0
    %vm925 = vcmp.lt.s32.totalorder %v923, 256
    %vm926 = vmand %vm924, %vm925
    %927 = vst.msk [vmem:[#allocation3] sm:$0x3] %vm926, %v921
    // Predicated region
    $region58: #{tpu_custom_call.1} parent=1 // pred_check
      _
    $region59: #{tpu_custom_call.1} parent=1 // pred_check_branch
      %929 = sbr.rel (0) target = $region61
    $region60: #{tpu_custom_call.1} parent=1 // pred_region
      %s931 = ssub.s32 32, 32
      %932 = vsyncadd [#allocation4], %s931
      %s934 = sshll.u32 [#allocation3], 4
      %s935 = int_to_ptr.vmem [resolvable:$true] %s934
      %937 = dma.vmem_to_hbm [thread:$0]  %s935, 32, %s14, [#allocation4]
    $region61: #{tpu_custom_call.1} parent=1 // pred_fallthru
      _
    // Predicated region
    $region62: #{tpu_custom_call.1} parent=1 // pred_check
      _
    $region63: #{tpu_custom_call.1} parent=1 // pred_check_branch
      %939 = sbr.rel (0) target = $region65
    $region64: #{tpu_custom_call.1} parent=1 // pred_region
      %940 = dma.done [#allocation4], 32
    $region65: #{tpu_custom_call.1} parent=1 // pred_fallthru
      _
    %941 = vsyncpa [#allocation4], 1

</llo_original>
